<compile_context>
chip_gen: v6e
topology: v6e:2x2x1
jax: 0.10.0
libtpu: 0.0.40
codegen_flags: <defaults>
</compile_context>

<pallas_src>
from functools import partial

import jax
import jax.numpy as jnp
from jax.experimental import pallas as pl
from jax.experimental.pallas import tpu as pltpu


# --------------------------------------------------------------------------
# Kernel
# --------------------------------------------------------------------------
def cbam_kernel(x_ref, w1t_ref, w2t_ref, ws_ref, bs_ref, o_ref, *, K, L_valid, ew_bf16):
    x_in = x_ref[...]                               # (Bb, C, Lp) native dtype
    xf = x_in.astype(jnp.float32)
    Bb, C, Lp = xf.shape
    pad = K // 2
    padded = Lp != L_valid

    # ---------------- Channel attention (shared SE MLP) ----------------
    if padded:
        lane3 = jax.lax.broadcasted_iota(jnp.int32, (1, 1, Lp), 2)
        valid3 = lane3 < L_valid
        maxp = jnp.max(jnp.where(valid3, xf, -jnp.inf), axis=2)     # (Bb, C)
        avgp = jnp.sum(xf, axis=2) * (1.0 / L_valid)                # (Bb, C)
    else:
        maxp = jnp.max(xf, axis=2)                  # (Bb, C)  AdaptiveMaxPool1d(1)
        avgp = jnp.mean(xf, axis=2)                 # (Bb, C)  AdaptiveAvgPool1d(1)
    p = jnp.concatenate([maxp, avgp], axis=0)       # (2*Bb, C) fused MLP RHS

    w1t = w1t_ref[...]                              # (C, H)  = Conv1d(C,H,1).weight.T
    w2t = w2t_ref[...]                              # (H, C)  = Conv1d(H,C,1).weight.T
    h = jnp.maximum(
        jnp.dot(p, w1t, preferred_element_type=jnp.float32), 0.0)   # (2*Bb, H)
    s = jnp.dot(h, w2t, preferred_element_type=jnp.float32)         # (2*Bb, C)
    ca = jax.nn.sigmoid(s[:Bb] + s[Bb:])            # (Bb, C) f32

    # out1 = x * ca  (bf16 elementwise on v6e/v7x when input is bf16)
    if ew_bf16:
        out1 = x_in * ca.astype(x_in.dtype)[:, :, None]
        out1_f = out1.astype(jnp.float32)           # consumed only by reductions
    else:
        out1 = xf * ca[:, :, None]
        out1_f = out1

    # ---------------- Spatial attention ----------------
    mx = jnp.max(out1_f, axis=1)                    # (Bb, Lp)  max over channels
    mn = jnp.mean(out1_f, axis=1)                   # (Bb, Lp)  mean over channels

    # Conv1d(2, 1, K, padding=K//2): K statically-unrolled taps, each a lane
    # rotation (XLU) + edge mask + scalar-times-vector FMA; stays in vregs.
    idx = jax.lax.broadcasted_iota(jnp.int32, (Bb, Lp), 1)
    w_max = [ws_ref[j] for j in range(K)]           # SMEM scalars, hoisted
    w_avg = [ws_ref[K + j] for j in range(K)]

    conv = jnp.zeros((Bb, Lp), jnp.float32)
    for j in range(K):                              # static unroll over taps
        shift = pad - j                             # out[l] needs in[l + j - pad]
        sh = shift % Lp
        if shift == 0:
            mx_s, mn_s = mx, mn
        else:
            mx_s = pltpu.roll(mx, sh, 1)
            mn_s = pltpu.roll(mn, sh, 1)
        tap = w_max[j] * mx_s + w_avg[j] * mn_s
        lo, hi = shift, L_valid - 1 + shift         # lanes with valid (unpadded) input
        if lo <= 0 and hi >= Lp - 1:
            conv = conv + tap
        else:
            mask = (idx >= lo) & (idx <= hi)
            conv = conv + jnp.where(mask, tap, 0.0)

    sa = jax.nn.sigmoid(conv + bs_ref[0])           # (Bb, Lp) f32

    if ew_bf16:
        out2 = out1 * sa.astype(x_in.dtype)[:, None, :]
        o_ref[...] = (out2 + x_in).astype(o_ref.dtype)
    else:
        out2 = out1 * sa[:, None, :]
        o_ref[...] = (out2 + xf).astype(o_ref.dtype)   # residual add


# --------------------------------------------------------------------------
# Generation / tiling policy
# --------------------------------------------------------------------------
def _tpu_generation_info():
    """Best-effort (vmem_capacity_bytes, tensorcores_per_chip, bf16_vpu_ok)."""
    kind = ""
    try:
        kind = jax.devices()[0].device_kind.lower()
    except Exception:
        pass

    n_tc = 2 if "v7" in kind else 1
    bf16_ok = not any(t in kind for t in ("v2", "v3", "v4", "v5 lite", "v5e", "v5lite"))

    vmem_cap = None
    try:
        vmem_cap = int(pltpu.get_tpu_info().vmem_capacity_bytes)
    except Exception:
        vmem_cap = None
    if vmem_cap is None:
        if "v7" in kind:
            vmem_cap = 64 << 20
        elif any(t in kind for t in ("v5", "v6")):
            vmem_cap = 128 << 20
        else:
            vmem_cap = 64 << 20          # conservative fallback
    return vmem_cap, n_tc, bf16_ok


def _choose_batch_block(B, C, Lp, itemsize, slab_budget_bytes, n_tensorcores):
    # Per batch element per grid step:
    #   double-buffered input + output DMA buffers (2 + 2 copies at `itemsize`)
    #   plus ~3 live f32 intermediates in the body (x_f32 / out1 / out2 temps).
    per_b = (4 * itemsize + 12) * C * Lp
    b_blk = max(1, min(B, slab_budget_bytes // per_b))
    if n_tensorcores >= 2 and B >= 2:
        # keep >= 2 grid steps so a 2-TC part (v7x) can shard the batch axis
        b_blk = min(b_blk, (B + 1) // 2)
    while B % b_blk:
        b_blk -= 1
    return b_blk


# --------------------------------------------------------------------------
# Wrapper
# --------------------------------------------------------------------------
def cbam_forward(x, w1, w2, ws, bias, kernel_size, *, slab_budget_bytes=None):
    B, C, L = x.shape
    H = w1.shape[0]
    K = int(kernel_size)
    assert K % 2 == 1, "kernel_size must be odd (PyTorch padding=K//2 preserves length only for odd K)"
    assert K // 2 < L, "padding K//2 must be smaller than the sequence length"
    itemsize = jnp.dtype(x.dtype).itemsize

    vmem_cap, n_tc, bf16_ok = _tpu_generation_info()
    if vmem_cap >= (100 << 20):                      # 128 MiB parts (v5e/v6e)
        vmem_limit = 96 << 20
        default_slab = 40 << 20
    else:                                            # 64 MiB (v7x) or unknown
        vmem_limit = max(16 << 20, min(48 << 20, vmem_cap - (16 << 20)))
        default_slab = 12 << 20
    if slab_budget_bytes is None:
        slab_budget_bytes = default_slab

    # Lane-dense output: pad L to a multiple of 128 so stores are unmasked vst.
    Lp = L if L % 128 == 0 else ((L + 127) // 128) * 128
    x_in = x if Lp == L else jnp.pad(x, ((0, 0), (0, 0), (0, Lp - L)))

    b_blk = _choose_batch_block(B, C, Lp, itemsize, slab_budget_bytes, n_tc)
    grid = (B // b_blk,)

    use_bf16_ew = bool(bf16_ok and x.dtype == jnp.bfloat16)

    # Pre-transpose the tiny SE weights (free in XLA) so in-kernel dots need no
    # transposes; flatten the spatial-conv params for 1-D SMEM scalar reads.
    w1t = jnp.asarray(w1, jnp.float32).T                 # (C, H)
    w2t = jnp.asarray(w2, jnp.float32).T                 # (H, C)
    ws_flat = jnp.asarray(ws, jnp.float32).reshape(-1)   # (2*K,) [max taps..., avg taps...]
    bias_flat = jnp.asarray(bias, jnp.float32).reshape(-1)[:1]   # (1,)

    cost = pl.CostEstimate(
        flops=int(B * (10 * C * Lp + 8 * C * H + 4 * K * Lp)),
        transcendentals=int(B * (C + Lp)),
        bytes_accessed=int(2 * B * C * Lp * itemsize),
    )

    kern = partial(cbam_kernel, K=K, L_valid=L, ew_bf16=use_bf16_ew)
    out = pl.pallas_call(
        kern,
        out_shape=jax.ShapeDtypeStruct((B, C, Lp), x.dtype),
        grid_spec=pltpu.PrefetchScalarGridSpec(
            num_scalar_prefetch=0,
            grid=grid,
            in_specs=[
                pl.BlockSpec((b_blk, C, Lp), lambda b: (b, 0, 0)),   # x batch slab
                pl.BlockSpec((C, H), lambda b: (0, 0)),              # SE weight 1 (transposed)
                pl.BlockSpec((H, C), lambda b: (0, 0)),              # SE weight 2 (transposed)
                pl.BlockSpec(memory_space=pltpu.MemorySpace.SMEM),   # spatial conv weight (2*K,)
                pl.BlockSpec(memory_space=pltpu.MemorySpace.SMEM),   # spatial conv bias (1,)
            ],
            out_specs=pl.BlockSpec((b_blk, C, Lp), lambda b: (b, 0, 0)),
        ),
        compiler_params=pltpu.CompilerParams(
            dimension_semantics=("parallel",),
            vmem_limit_bytes=int(vmem_limit),
        ),
        cost_estimate=cost,
    )(x_in, w1t, w2t, ws_flat, bias_flat)

    return out if Lp == L else out[:, :, :L]


# --------------------------------------------------------------------------
# Pure-JAX reference matching the PyTorch forward
# --------------------------------------------------------------------------
def cbam_reference(x, w1, w2, ws, bias, kernel_size):
    maxp = jnp.max(x, axis=2, keepdims=True)
    avgp = jnp.mean(x, axis=2, keepdims=True)

    def se(p):
        h = jnp.maximum(jnp.einsum('hc,bcl->bhl', w1, p), 0.0)
        return jnp.einsum('ch,bhl->bcl', w2, h)

    ca = jax.nn.sigmoid(se(maxp) + se(avgp))
    out1 = x * ca

    mx = jnp.max(out1, axis=1, keepdims=True)
    mn = jnp.mean(out1, axis=1, keepdims=True)
    stacked = jnp.concatenate([mx, mn], axis=1)     # (B, 2, L)
    conv = jax.lax.conv_general_dilated(
        stacked, ws.reshape(1, 2, kernel_size),
        window_strides=(1,),
        padding=[(kernel_size // 2, kernel_size // 2)],
        dimension_numbers=('NCH', 'OIH', 'NCH'))
    sa = jax.nn.sigmoid(conv + bias.reshape(1, 1, 1))
    out2 = out1 * sa
    return out2 + x


# --------------------------------------------------------------------------
# Self-test
# --------------------------------------------------------------------------
if __name__ == "__main__":
    def make_case(key, B, C, L, reduction, K):
        H = max(1, C // reduction)
        k1, k2, k3, k4, k5 = jax.random.split(key, 5)
        x = jax.random.normal(k1, (B, C, L), jnp.float32)
        # Deterministic synthetic parameters (shapes from the module's __init__):
        w1 = jax.random.normal(k2, (H, C), jnp.float32) * 0.1    # Conv1d(C, C//r, 1, bias=False)
        w2 = jax.random.normal(k3, (C, H), jnp.float32) * 0.1    # Conv1d(C//r, C, 1, bias=False)
        ws = jax.random.normal(k4, (2, K), jnp.float32) * 0.1    # Conv1d(2, 1, K) weight
        bias = jax.random.normal(k5, (1, 1), jnp.float32) * 0.1  # Conv1d(2, 1, K) bias
        return x, w1, w2, ws, bias

    # Case 1: lane-aligned L (no padding path).
    x, w1, w2, ws, bias = make_case(jax.random.PRNGKey(0), B=4, C=32, L=128, reduction=4, K=7)
    out = cbam_forward(x, w1, w2, ws, bias, 7)
    jax.block_until_ready(out)
    ref = cbam_reference(x, w1, w2, ws, bias, 7)
    assert jnp.allclose(out, ref, atol=1e-4, rtol=1e-4), float(jnp.max(jnp.abs(out - ref)))

    # Case 2: L not a multiple of 128 -> exercises the lane-dense padding path.
    x2, w1b, w2b, wsb, biasb = make_case(jax.random.PRNGKey(1), B=2, C=16, L=96, reduction=4, K=5)
    out2 = cbam_forward(x2, w1b, w2b, wsb, biasb, 5)
    jax.block_until_ready(out2)
    ref2 = cbam_reference(x2, w1b, w2b, wsb, biasb, 5)
    assert jnp.allclose(out2, ref2, atol=1e-4, rtol=1e-4), float(jnp.max(jnp.abs(out2 - ref2)))

    print("KERNEL_OK")
</pallas_src>

<mosaic_0001>
module attributes {stable_mosaic.version = 11 : i64} {
  func.func @cbam_kernel(%arg0: i32, %arg1: memref<4x32x128xf32, #tpu.memory_space<vmem>>, %arg2: memref<32x8xf32, #tpu.memory_space<vmem>>, %arg3: memref<8x32xf32, #tpu.memory_space<vmem>>, %arg4: memref<14xf32, #tpu.memory_space<smem>>, %arg5: memref<1xf32, #tpu.memory_space<smem>>, %arg6: memref<4x32x128xf32, #tpu.memory_space<vmem>>) attributes {dimension_semantics = [#tpu.dimension_semantics<parallel>], iteration_bounds = array<i64: 1>, scalar_prefetch = 0 : i64, scratch_operands = 0 : i64, tpu.core_type = #tpu.core_type<tc>, window_params = [{transform_indices = @transform_0, window_bounds = array<i64: 4, 32, 128>}, {pipeline_mode = #tpu.pipeline_mode<synchronous>, transform_indices = @transform_1, window_bounds = array<i64: 32, 8>}, {pipeline_mode = #tpu.pipeline_mode<synchronous>, transform_indices = @transform_2, window_bounds = array<i64: 8, 32>}, {transform_indices = @transform_3, window_bounds = array<i64: 14>}, {transform_indices = @transform_4, window_bounds = array<i64: 1>}, {transform_indices = @transform_5, window_bounds = array<i64: 4, 32, 128>}]} {
    %c0 = arith.constant 0 : index
    %c0_0 = arith.constant 0 : index
    %c0_1 = arith.constant 0 : index
    %0 = vector.load %arg1[%c0, %c0_0, %c0_1] : memref<4x32x128xf32, #tpu.memory_space<vmem>>, vector<4x32x128xf32>
    %cst = arith.constant dense<0xFF800000> : vector<4x32xf32>
    %1 = vector.multi_reduction <maximumf>, %0, %cst [2] : vector<4x32x128xf32> to vector<4x32xf32>
    %cst_2 = arith.constant dense<0.000000e+00> : vector<4x32xf32>
    %2 = vector.multi_reduction <add>, %0, %cst_2 [2] : vector<4x32x128xf32> to vector<4x32xf32>
    %cst_3 = arith.constant 1.280000e+02 : f32
    %3 = vector.broadcast %cst_3 : f32 to vector<4x32xf32>
    %4 = arith.divf %2, %3 : vector<4x32xf32>
    %5 = tpu.concatenate %1, %4 in 0 : vector<4x32xf32>, vector<4x32xf32> -> vector<8x32xf32>
    %c0_4 = arith.constant 0 : index
    %c0_5 = arith.constant 0 : index
    %6 = vector.load %arg2[%c0_4, %c0_5] : memref<32x8xf32, #tpu.memory_space<vmem>>, vector<32x8xf32>
    %c0_6 = arith.constant 0 : index
    %c0_7 = arith.constant 0 : index
    %7 = vector.load %arg3[%c0_6, %c0_7] : memref<8x32xf32, #tpu.memory_space<vmem>>, vector<8x32xf32>
    %cst_8 = arith.constant dense<0.000000e+00> : vector<8x8xf32>
    %8 = tpu.matmul %5, %6, %cst_8 {dimension_numbers = #tpu.dot_dimension_numbers<[1], [0], [0], [1], [0, 0, 1, 1], [], []>} : vector<8x32xf32>, vector<32x8xf32>, vector<8x8xf32> -> vector<8x8xf32>
    %cst_9 = arith.constant 0.000000e+00 : f32
    %9 = vector.broadcast %cst_9 : f32 to vector<8x8xf32>
    %10 = arith.maximumf %8, %9 : vector<8x8xf32>
    %cst_10 = arith.constant dense<0.000000e+00> : vector<8x32xf32>
    %11 = tpu.matmul %10, %7, %cst_10 {dimension_numbers = #tpu.dot_dimension_numbers<[1], [0], [0], [1], [0, 0, 1, 1], [], []>} : vector<8x8xf32>, vector<8x32xf32>, vector<8x32xf32> -> vector<8x32xf32>
    %12 = vector.extract_strided_slice %11 {offsets = [0, 0], sizes = [4, 32], strides = [1, 1]} : vector<8x32xf32> to vector<4x32xf32>
    %13 = vector.extract_strided_slice %11 {offsets = [4, 0], sizes = [4, 32], strides = [1, 1]} : vector<8x32xf32> to vector<4x32xf32>
    %14 = arith.addf %12, %13 : vector<4x32xf32>
    %15 = arith.negf %14 : vector<4x32xf32>
    %16 = math.exp %15 : vector<4x32xf32>
    %cst_11 = arith.constant 1.000000e+00 : f32
    %17 = vector.broadcast %cst_11 : f32 to vector<4x32xf32>
    %18 = arith.addf %17, %16 : vector<4x32xf32>
    %19 = arith.divf %17, %18 : vector<4x32xf32>
    %20 = vector.shape_cast %19 : vector<4x32xf32> to vector<4x32x1xf32>
    %21 = vector.broadcast %20 : vector<4x32x1xf32> to vector<4x32x128xf32>
    %22 = arith.mulf %0, %21 : vector<4x32x128xf32>
    %cst_12 = arith.constant dense<0xFF800000> : vector<4x128xf32>
    %23 = vector.multi_reduction <maximumf>, %22, %cst_12 [1] : vector<4x32x128xf32> to vector<4x128xf32>
    %cst_13 = arith.constant dense<0.000000e+00> : vector<4x128xf32>
    %24 = vector.multi_reduction <add>, %22, %cst_13 [1] : vector<4x32x128xf32> to vector<4x128xf32>
    %cst_14 = arith.constant 3.200000e+01 : f32
    %25 = vector.broadcast %cst_14 : f32 to vector<4x128xf32>
    %26 = arith.divf %24, %25 : vector<4x128xf32>
    %27 = tpu.iota {dimensions = array<i32: 1>} : vector<4x128xi32>
    %c0_15 = arith.constant 0 : index
    %28 = memref.load %arg4[%c0_15] : memref<14xf32, #tpu.memory_space<smem>>
    %c1 = arith.constant 1 : index
    %29 = memref.load %arg4[%c1] : memref<14xf32, #tpu.memory_space<smem>>
    %c2 = arith.constant 2 : index
    %30 = memref.load %arg4[%c2] : memref<14xf32, #tpu.memory_space<smem>>
    %c3 = arith.constant 3 : index
    %31 = memref.load %arg4[%c3] : memref<14xf32, #tpu.memory_space<smem>>
    %c4 = arith.constant 4 : index
    %32 = memref.load %arg4[%c4] : memref<14xf32, #tpu.memory_space<smem>>
    %c5 = arith.constant 5 : index
    %33 = memref.load %arg4[%c5] : memref<14xf32, #tpu.memory_space<smem>>
    %c6 = arith.constant 6 : index
    %34 = memref.load %arg4[%c6] : memref<14xf32, #tpu.memory_space<smem>>
    %c7 = arith.constant 7 : index
    %35 = memref.load %arg4[%c7] : memref<14xf32, #tpu.memory_space<smem>>
    %c8 = arith.constant 8 : index
    %36 = memref.load %arg4[%c8] : memref<14xf32, #tpu.memory_space<smem>>
    %c9 = arith.constant 9 : index
    %37 = memref.load %arg4[%c9] : memref<14xf32, #tpu.memory_space<smem>>
    %c10 = arith.constant 10 : index
    %38 = memref.load %arg4[%c10] : memref<14xf32, #tpu.memory_space<smem>>
    %c11 = arith.constant 11 : index
    %39 = memref.load %arg4[%c11] : memref<14xf32, #tpu.memory_space<smem>>
    %c12 = arith.constant 12 : index
    %40 = memref.load %arg4[%c12] : memref<14xf32, #tpu.memory_space<smem>>
    %c13 = arith.constant 13 : index
    %41 = memref.load %arg4[%c13] : memref<14xf32, #tpu.memory_space<smem>>
    %cst_16 = arith.constant 0.000000e+00 : f32
    %42 = vector.broadcast %cst_16 : f32 to vector<4x128xf32>
    %c3_i32 = arith.constant 3 : i32
    %43 = tpu.dynamic_rotate %23 by %c3_i32 dim 1 : vector<4x128xf32>, i32 -> vector<4x128xf32>
    %c3_i32_17 = arith.constant 3 : i32
    %44 = tpu.dynamic_rotate %26 by %c3_i32_17 dim 1 : vector<4x128xf32>, i32 -> vector<4x128xf32>
    %45 = vector.broadcast %28 : f32 to vector<4x128xf32>
    %46 = arith.mulf %45, %43 : vector<4x128xf32>
    %47 = vector.broadcast %35 : f32 to vector<4x128xf32>
    %48 = arith.mulf %47, %44 : vector<4x128xf32>
    %49 = arith.addf %46, %48 : vector<4x128xf32>
    %c3_i32_18 = arith.constant 3 : i32
    %50 = vector.broadcast %c3_i32_18 : i32 to vector<4x128xi32>
    %51 = arith.cmpi sge, %27, %50 : vector<4x128xi32>
    %c130_i32 = arith.constant 130 : i32
    %52 = vector.broadcast %c130_i32 : i32 to vector<4x128xi32>
    %53 = arith.cmpi sle, %27, %52 : vector<4x128xi32>
    %54 = arith.andi %51, %53 : vector<4x128xi1>
    %cst_19 = arith.constant 0.000000e+00 : f32
    %55 = vector.broadcast %cst_19 : f32 to vector<4x128xf32>
    %56 = arith.select %54, %49, %55 : vector<4x128xi1>, vector<4x128xf32>
    %57 = arith.addf %42, %56 : vector<4x128xf32>
    %c2_i32 = arith.constant 2 : i32
    %58 = tpu.dynamic_rotate %23 by %c2_i32 dim 1 : vector<4x128xf32>, i32 -> vector<4x128xf32>
    %c2_i32_20 = arith.constant 2 : i32
    %59 = tpu.dynamic_rotate %26 by %c2_i32_20 dim 1 : vector<4x128xf32>, i32 -> vector<4x128xf32>
    %60 = vector.broadcast %29 : f32 to vector<4x128xf32>
    %61 = arith.mulf %60, %58 : vector<4x128xf32>
    %62 = vector.broadcast %36 : f32 to vector<4x128xf32>
    %63 = arith.mulf %62, %59 : vector<4x128xf32>
    %64 = arith.addf %61, %63 : vector<4x128xf32>
    %c2_i32_21 = arith.constant 2 : i32
    %65 = vector.broadcast %c2_i32_21 : i32 to vector<4x128xi32>
    %66 = arith.cmpi sge, %27, %65 : vector<4x128xi32>
    %c129_i32 = arith.constant 129 : i32
    %67 = vector.broadcast %c129_i32 : i32 to vector<4x128xi32>
    %68 = arith.cmpi sle, %27, %67 : vector<4x128xi32>
    %69 = arith.andi %66, %68 : vector<4x128xi1>
    %cst_22 = arith.constant 0.000000e+00 : f32
    %70 = vector.broadcast %cst_22 : f32 to vector<4x128xf32>
    %71 = arith.select %69, %64, %70 : vector<4x128xi1>, vector<4x128xf32>
    %72 = arith.addf %57, %71 : vector<4x128xf32>
    %c1_i32 = arith.constant 1 : i32
    %73 = tpu.dynamic_rotate %23 by %c1_i32 dim 1 : vector<4x128xf32>, i32 -> vector<4x128xf32>
    %c1_i32_23 = arith.constant 1 : i32
    %74 = tpu.dynamic_rotate %26 by %c1_i32_23 dim 1 : vector<4x128xf32>, i32 -> vector<4x128xf32>
    %75 = vector.broadcast %30 : f32 to vector<4x128xf32>
    %76 = arith.mulf %75, %73 : vector<4x128xf32>
    %77 = vector.broadcast %37 : f32 to vector<4x128xf32>
    %78 = arith.mulf %77, %74 : vector<4x128xf32>
    %79 = arith.addf %76, %78 : vector<4x128xf32>
    %c1_i32_24 = arith.constant 1 : i32
    %80 = vector.broadcast %c1_i32_24 : i32 to vector<4x128xi32>
    %81 = arith.cmpi sge, %27, %80 : vector<4x128xi32>
    %c128_i32 = arith.constant 128 : i32
    %82 = vector.broadcast %c128_i32 : i32 to vector<4x128xi32>
    %83 = arith.cmpi sle, %27, %82 : vector<4x128xi32>
    %84 = arith.andi %81, %83 : vector<4x128xi1>
    %cst_25 = arith.constant 0.000000e+00 : f32
    %85 = vector.broadcast %cst_25 : f32 to vector<4x128xf32>
    %86 = arith.select %84, %79, %85 : vector<4x128xi1>, vector<4x128xf32>
    %87 = arith.addf %72, %86 : vector<4x128xf32>
    %88 = vector.broadcast %31 : f32 to vector<4x128xf32>
    %89 = arith.mulf %88, %23 : vector<4x128xf32>
    %90 = vector.broadcast %38 : f32 to vector<4x128xf32>
    %91 = arith.mulf %90, %26 : vector<4x128xf32>
    %92 = arith.addf %89, %91 : vector<4x128xf32>
    %93 = arith.addf %87, %92 : vector<4x128xf32>
    %c127_i32 = arith.constant 127 : i32
    %94 = tpu.dynamic_rotate %23 by %c127_i32 dim 1 : vector<4x128xf32>, i32 -> vector<4x128xf32>
    %c127_i32_26 = arith.constant 127 : i32
    %95 = tpu.dynamic_rotate %26 by %c127_i32_26 dim 1 : vector<4x128xf32>, i32 -> vector<4x128xf32>
    %96 = vector.broadcast %32 : f32 to vector<4x128xf32>
    %97 = arith.mulf %96, %94 : vector<4x128xf32>
    %98 = vector.broadcast %39 : f32 to vector<4x128xf32>
    %99 = arith.mulf %98, %95 : vector<4x128xf32>
    %100 = arith.addf %97, %99 : vector<4x128xf32>
    %c-1_i32 = arith.constant -1 : i32
    %101 = vector.broadcast %c-1_i32 : i32 to vector<4x128xi32>
    %102 = arith.cmpi sge, %27, %101 : vector<4x128xi32>
    %c126_i32 = arith.constant 126 : i32
    %103 = vector.broadcast %c126_i32 : i32 to vector<4x128xi32>
    %104 = arith.cmpi sle, %27, %103 : vector<4x128xi32>
    %105 = arith.andi %102, %104 : vector<4x128xi1>
    %cst_27 = arith.constant 0.000000e+00 : f32
    %106 = vector.broadcast %cst_27 : f32 to vector<4x128xf32>
    %107 = arith.select %105, %100, %106 : vector<4x128xi1>, vector<4x128xf32>
    %108 = arith.addf %93, %107 : vector<4x128xf32>
    %c126_i32_28 = arith.constant 126 : i32
    %109 = tpu.dynamic_rotate %23 by %c126_i32_28 dim 1 : vector<4x128xf32>, i32 -> vector<4x128xf32>
    %c126_i32_29 = arith.constant 126 : i32
    %110 = tpu.dynamic_rotate %26 by %c126_i32_29 dim 1 : vector<4x128xf32>, i32 -> vector<4x128xf32>
    %111 = vector.broadcast %33 : f32 to vector<4x128xf32>
    %112 = arith.mulf %111, %109 : vector<4x128xf32>
    %113 = vector.broadcast %40 : f32 to vector<4x128xf32>
    %114 = arith.mulf %113, %110 : vector<4x128xf32>
    %115 = arith.addf %112, %114 : vector<4x128xf32>
    %c-2_i32 = arith.constant -2 : i32
    %116 = vector.broadcast %c-2_i32 : i32 to vector<4x128xi32>
    %117 = arith.cmpi sge, %27, %116 : vector<4x128xi32>
    %c125_i32 = arith.constant 125 : i32
    %118 = vector.broadcast %c125_i32 : i32 to vector<4x128xi32>
    %119 = arith.cmpi sle, %27, %118 : vector<4x128xi32>
    %120 = arith.andi %117, %119 : vector<4x128xi1>
    %cst_30 = arith.constant 0.000000e+00 : f32
    %121 = vector.broadcast %cst_30 : f32 to vector<4x128xf32>
    %122 = arith.select %120, %115, %121 : vector<4x128xi1>, vector<4x128xf32>
    %123 = arith.addf %108, %122 : vector<4x128xf32>
    %c125_i32_31 = arith.constant 125 : i32
    %124 = tpu.dynamic_rotate %23 by %c125_i32_31 dim 1 : vector<4x128xf32>, i32 -> vector<4x128xf32>
    %c125_i32_32 = arith.constant 125 : i32
    %125 = tpu.dynamic_rotate %26 by %c125_i32_32 dim 1 : vector<4x128xf32>, i32 -> vector<4x128xf32>
    %126 = vector.broadcast %34 : f32 to vector<4x128xf32>
    %127 = arith.mulf %126, %124 : vector<4x128xf32>
    %128 = vector.broadcast %41 : f32 to vector<4x128xf32>
    %129 = arith.mulf %128, %125 : vector<4x128xf32>
    %130 = arith.addf %127, %129 : vector<4x128xf32>
    %c-3_i32 = arith.constant -3 : i32
    %131 = vector.broadcast %c-3_i32 : i32 to vector<4x128xi32>
    %132 = arith.cmpi sge, %27, %131 : vector<4x128xi32>
    %c124_i32 = arith.constant 124 : i32
    %133 = vector.broadcast %c124_i32 : i32 to vector<4x128xi32>
    %134 = arith.cmpi sle, %27, %133 : vector<4x128xi32>
    %135 = arith.andi %132, %134 : vector<4x128xi1>
    %cst_33 = arith.constant 0.000000e+00 : f32
    %136 = vector.broadcast %cst_33 : f32 to vector<4x128xf32>
    %137 = arith.select %135, %130, %136 : vector<4x128xi1>, vector<4x128xf32>
    %138 = arith.addf %123, %137 : vector<4x128xf32>
    %c0_34 = arith.constant 0 : index
    %139 = memref.load %arg5[%c0_34] : memref<1xf32, #tpu.memory_space<smem>>
    %140 = vector.broadcast %139 : f32 to vector<4x128xf32>
    %141 = arith.addf %138, %140 : vector<4x128xf32>
    %142 = arith.negf %141 : vector<4x128xf32>
    %143 = math.exp %142 : vector<4x128xf32>
    %cst_35 = arith.constant 1.000000e+00 : f32
    %144 = vector.broadcast %cst_35 : f32 to vector<4x128xf32>
    %145 = arith.addf %144, %143 : vector<4x128xf32>
    %146 = arith.divf %144, %145 : vector<4x128xf32>
    %147 = vector.shape_cast %146 : vector<4x128xf32> to vector<4x1x128xf32>
    %148 = vector.broadcast %147 : vector<4x1x128xf32> to vector<4x32x128xf32>
    %149 = arith.mulf %22, %148 : vector<4x32x128xf32>
    %150 = arith.addf %149, %0 : vector<4x32x128xf32>
    %c0_36 = arith.constant 0 : index
    %c0_37 = arith.constant 0 : index
    %c0_38 = arith.constant 0 : index
    %151 = vector.load %arg6[%c0_36, %c0_37, %c0_38] : memref<4x32x128xf32, #tpu.memory_space<vmem>>, vector<4x32x128xf32>
    tpu.vector_store %arg6[%c0_36, %c0_37, %c0_38], %150 {strides = array<i32>} : memref<4x32x128xf32, #tpu.memory_space<vmem>>, vector<4x32x128xf32>,
    return
  }
  func.func @transform_0(%arg0: i32) -> (i32, i32, i32) {
    %c0_i32 = arith.constant 0 : i32
    %c0_i32_0 = arith.constant 0 : i32
    %c0_i32_1 = arith.constant 0 : i32
    return %arg0, %c0_i32, %c0_i32_0 : i32, i32, i32
  }
  func.func @transform_1(%arg0: i32) -> (i32, i32) {
    %c0_i32 = arith.constant 0 : i32
    %c0_i32_0 = arith.constant 0 : i32
    %c0_i32_1 = arith.constant 0 : i32
    return %c0_i32, %c0_i32_0 : i32, i32
  }
  func.func @transform_2(%arg0: i32) -> (i32, i32) {
    %c0_i32 = arith.constant 0 : i32
    %c0_i32_0 = arith.constant 0 : i32
    %c0_i32_1 = arith.constant 0 : i32
    return %c0_i32, %c0_i32_0 : i32, i32
  }
  func.func @transform_3(%arg0: i32) -> i32 {
    %c0_i32 = arith.constant 0 : i32
    %c0_i32_0 = arith.constant 0 : i32
    return %c0_i32 : i32
  }
  func.func @transform_4(%arg0: i32) -> i32 {
    %c0_i32 = arith.constant 0 : i32
    %c0_i32_0 = arith.constant 0 : i32
    return %c0_i32 : i32
  }
  func.func @transform_5(%arg0: i32) -> (i32, i32, i32) {
    %c0_i32 = arith.constant 0 : i32
    %c0_i32_0 = arith.constant 0 : i32
    %c0_i32_1 = arith.constant 0 : i32
    return %arg0, %c0_i32, %c0_i32_0 : i32, i32, i32
  }
}

</mosaic_0001>

<llo_original>
// kernel: tpu_custom_call.1
$region0: #{tpu_custom_call.1}
  #allocation0 [shape = 'u32[]', space=smem, size = 0x4, offset = 0x4, fixed_abs, tag = 'smem constant byte address 0x4 - core index']
  #allocation1 [shape = 'u32[144,128]{1,0:T(1,128)}', space=vmem, size = 0x12000, scoped, tag = 'internal scratch']
  #allocation2 [shape = 'f32[1]{0:T(128)S(6)}', space=smem, size = 0x200, scoped, tag = 'scoped memory for tpu_custom_call.1']
  %s0 = inlined_call_operand.hbm [shape: f32[4,32,128], index: 0, kind: input, shape index: {}]
  %s1 = inlined_call_operand.vmem [shape: f32[32,8], index: 1, kind: input, shape index: {}]
  %s2 = inlined_call_operand.vmem [shape: f32[8,32], index: 2, kind: input, shape index: {}]
  %s3 = inlined_call_operand.vmem [shape: f32[14], index: 3, kind: input, shape index: {}]
  %s4 = inlined_call_operand.<no memory space> [shape: f32[1], index: 4, kind: input, shape index: {}]
  %s5 = inlined_call_operand.hbm [shape: f32[4,32,128], index: 5, kind: output, shape index: {}]
  %s6 = sld [smem:[#allocation0]]
  $region38: #{tpu_custom_call.1} parent=0
    _
  %s8 = ssub.s32 1, %s6
  %s9 = scalar_select 0, %s8, %s6
  %10 = sst [smem:[#allocation2]] %s4
  $region1: #{tpu_custom_call.1} parent=0
    #allocation3 [shape = 'u8[65536]{0}', space=vmem, size = 0x10000, scoped, tag = 'input window, operand 0, single buffered']
    #allocation4 [shape = 's32[1]{0}', space=sflag, size = 0x4, scoped, tag = 'scoped memory for tpu_custom_call.1']
    #allocation5 [shape = 's32[1]{0}', space=sflag, size = 0x4, scoped, tag = 'scoped memory for tpu_custom_call.1']
    #allocation6 [shape = 's32[1]{0}', space=sflag, size = 0x4, scoped, tag = 'scoped memory for tpu_custom_call.1']
    #allocation7 [shape = 'u8[512]{0}', space=smem, size = 0x200, scoped, tag = 'input window, operand 3, single buffered']
    #allocation8 [shape = 'u8[65536]{0}', space=vmem, size = 0x10000, scoped, tag = 'output window, operand 0, single buffered']
    %11 = vsyncpa [#allocation4], 0
    %12 = vsyncpa [#allocation6], 0
    %13 = vsyncpa [#allocation5], 0
    // Predicated region
    $region2: #{tpu_custom_call.1} parent=1 // pred_check
      _
    $region3: #{tpu_custom_call.1} parent=1 // pred_check_branch
      %15 = sbr.rel (0) target = $region5
    $region4: #{tpu_custom_call.1} parent=1 // pred_region
      %s17 = ssub.s32 2048, 2048
      %18 = vsyncadd [#allocation4], %s17
      %s19 = sshll.u32 [#allocation3], 4
      %s20 = int_to_ptr.vmem [resolvable:$true] %s19
      %25 = dma.hbm_to_vmem [thread:$0]  %s0, 2048, %s20, [#allocation4], 128, 128, 8
    $region5: #{tpu_custom_call.1} parent=1 // pred_fallthru
      _
    // Predicated region
    $region6: #{tpu_custom_call.1} parent=1 // pred_check
      _
    $region7: #{tpu_custom_call.1} parent=1 // pred_check_branch
      %27 = sbr.rel (0) target = $region9
    $region8: #{tpu_custom_call.1} parent=1 // pred_region
      _
    $region9: #{tpu_custom_call.1} parent=1 // pred_fallthru
      _
    // Predicated region
    $region10: #{tpu_custom_call.1} parent=1 // pred_check
      _
    $region11: #{tpu_custom_call.1} parent=1 // pred_check_branch
      %29 = sbr.rel (0) target = $region13
    $region12: #{tpu_custom_call.1} parent=1 // pred_region
      _
    $region13: #{tpu_custom_call.1} parent=1 // pred_fallthru
      _
    // Predicated region
    $region14: #{tpu_custom_call.1} parent=1 // pred_check
      _
    $region15: #{tpu_custom_call.1} parent=1 // pred_check_branch
      %31 = sbr.rel (0) target = $region17
    $region16: #{tpu_custom_call.1} parent=1 // pred_region
      %s33 = ssub.s32 16, 16
      %34 = vsyncadd [#allocation6], %s33
      %s36 = sshll.u32 %s3, 4
      %s37 = int_to_ptr.vmem [resolvable:$true] %s36
      %39 = dma.vmem_to_smem %s37, 16, [#allocation7], [#allocation6]
    $region17: #{tpu_custom_call.1} parent=1 // pred_fallthru
      _
    // Predicated region
    $region18: #{tpu_custom_call.1} parent=1 // pred_check
      _
    $region19: #{tpu_custom_call.1} parent=1 // pred_check_branch
      %41 = sbr.rel (0) target = $region21
    $region20: #{tpu_custom_call.1} parent=1 // pred_region
      _
    $region21: #{tpu_custom_call.1} parent=1 // pred_fallthru
      _
    // Predicated region
    $region22: #{tpu_custom_call.1} parent=1 // pred_check
      _
    $region23: #{tpu_custom_call.1} parent=1 // pred_check_branch
      %43 = sbr.rel (0) target = $region25
    $region24: #{tpu_custom_call.1} parent=1 // pred_region
      %44 = dma.done [#allocation4], 2048
    $region25: #{tpu_custom_call.1} parent=1 // pred_fallthru
      _
    // Predicated region
    $region26: #{tpu_custom_call.1} parent=1 // pred_check
      _
    $region27: #{tpu_custom_call.1} parent=1 // pred_check_branch
      %46 = sbr.rel (0) target = $region29
    $region28: #{tpu_custom_call.1} parent=1 // pred_region
      %47 = dma.done [#allocation6], 16
    $region29: #{tpu_custom_call.1} parent=1 // pred_fallthru
      _
    %48 = sfence
    %v49 = vld [vmem:[#allocation3] sm:$0xff]
    %v50 = vld [vmem:[#allocation3 + $0x8] sm:$0xff]
    %v51 = vld [vmem:[#allocation3 + $0x10] sm:$0xff]
    %v52 = vld [vmem:[#allocation3 + $0x18] sm:$0xff]
    %v53 = vld [vmem:[#allocation3 + $0x20] sm:$0xff]
    %v54 = vld [vmem:[#allocation3 + $0x28] sm:$0xff]
    %v55 = vld [vmem:[#allocation3 + $0x30] sm:$0xff]
    %v56 = vld [vmem:[#allocation3 + $0x38] sm:$0xff]
    %v57 = vld [vmem:[#allocation3 + $0x40] sm:$0xff]
    %v58 = vld [vmem:[#allocation3 + $0x48] sm:$0xff]
    %v59 = vld [vmem:[#allocation3 + $0x50] sm:$0xff]
    %v60 = vld [vmem:[#allocation3 + $0x58] sm:$0xff]
    %v61 = vld [vmem:[#allocation3 + $0x60] sm:$0xff]
    %v62 = vld [vmem:[#allocation3 + $0x68] sm:$0xff]
    %v63 = vld [vmem:[#allocation3 + $0x70] sm:$0xff]
    %v64 = vld [vmem:[#allocation3 + $0x78] sm:$0xff]
    %65 = vmax.xlane.f32.xlu0 %v49
    %v66 = vpop.xlane.xlu0 %65
    %67 = vmax.xlane.f32.xlu0 %v50
    %v68 = vpop.xlane.xlu0 %67
    %69 = vmax.xlane.f32.xlu0 %v51
    %v70 = vpop.xlane.xlu0 %69
    %71 = vmax.xlane.f32.xlu0 %v52
    %v72 = vpop.xlane.xlu0 %71
    %73 = vmax.xlane.f32.xlu0 %v53
    %v74 = vpop.xlane.xlu0 %73
    %75 = vmax.xlane.f32.xlu0 %v54
    %v76 = vpop.xlane.xlu0 %75
    %77 = vmax.xlane.f32.xlu0 %v55
    %v78 = vpop.xlane.xlu0 %77
    %79 = vmax.xlane.f32.xlu0 %v56
    %v80 = vpop.xlane.xlu0 %79
    %81 = vmax.xlane.f32.xlu0 %v57
    %v82 = vpop.xlane.xlu0 %81
    %83 = vmax.xlane.f32.xlu0 %v58
    %v84 = vpop.xlane.xlu0 %83
    %85 = vmax.xlane.f32.xlu0 %v59
    %v86 = vpop.xlane.xlu0 %85
    %87 = vmax.xlane.f32.xlu0 %v60
    %v88 = vpop.xlane.xlu0 %87
    %89 = vmax.xlane.f32.xlu0 %v61
    %v90 = vpop.xlane.xlu0 %89
    %91 = vmax.xlane.f32.xlu0 %v62
    %v92 = vpop.xlane.xlu0 %91
    %93 = vmax.xlane.f32.xlu0 %v63
    %v94 = vpop.xlane.xlu0 %93
    %95 = vmax.xlane.f32.xlu0 %v64
    %v96 = vpop.xlane.xlu0 %95
    %97 = vadd.xlane.f32.xlu0 %v49
    %v98 = vpop.xlane.xlu0 %97
    %99 = vadd.xlane.f32.xlu0 %v50
    %v100 = vpop.xlane.xlu0 %99
    %101 = vadd.xlane.f32.xlu0 %v51
    %v102 = vpop.xlane.xlu0 %101
    %103 = vadd.xlane.f32.xlu0 %v52
    %v104 = vpop.xlane.xlu0 %103
    %105 = vadd.xlane.f32.xlu0 %v53
    %v106 = vpop.xlane.xlu0 %105
    %107 = vadd.xlane.f32.xlu0 %v54
    %v108 = vpop.xlane.xlu0 %107
    %109 = vadd.xlane.f32.xlu0 %v55
    %v110 = vpop.xlane.xlu0 %109
    %111 = vadd.xlane.f32.xlu0 %v56
    %v112 = vpop.xlane.xlu0 %111
    %113 = vadd.xlane.f32.xlu0 %v57
    %v114 = vpop.xlane.xlu0 %113
    %115 = vadd.xlane.f32.xlu0 %v58
    %v116 = vpop.xlane.xlu0 %115
    %117 = vadd.xlane.f32.xlu0 %v59
    %v118 = vpop.xlane.xlu0 %117
    %119 = vadd.xlane.f32.xlu0 %v60
    %v120 = vpop.xlane.xlu0 %119
    %121 = vadd.xlane.f32.xlu0 %v61
    %v122 = vpop.xlane.xlu0 %121
    %123 = vadd.xlane.f32.xlu0 %v62
    %v124 = vpop.xlane.xlu0 %123
    %125 = vadd.xlane.f32.xlu0 %v63
    %v126 = vpop.xlane.xlu0 %125
    %127 = vadd.xlane.f32.xlu0 %v64
    %v128 = vpop.xlane.xlu0 %127
    %v129 = vrcp.pop 128.0
    %v130 = vmul.f32 %v98, %v129
    %v131 = vmul.f32 %v100, %v129
    %v132 = vmul.f32 %v102, %v129
    %v133 = vmul.f32 %v104, %v129
    %v134 = vmul.f32 %v106, %v129
    %v135 = vmul.f32 %v108, %v129
    %v136 = vmul.f32 %v110, %v129
    %v137 = vmul.f32 %v112, %v129
    %v138 = vmul.f32 %v114, %v129
    %v139 = vmul.f32 %v116, %v129
    %v140 = vmul.f32 %v118, %v129
    %v141 = vmul.f32 %v120, %v129
    %v142 = vmul.f32 %v122, %v129
    %v143 = vmul.f32 %v124, %v129
    %v144 = vmul.f32 %v126, %v129
    %v145 = vmul.f32 %v128, %v129
    %v162 = vlaneseq
    %v163 = vand.u32 %v162, 127
    %v164 = vlaneseq
    %v165 = vshrl.u32 %v164, 7
    %v166 = vsub.s32 %v163, %v165
    %v167 = vrot.slane %v66, %v166
    %v168 = vadd.s32 %v163, 4294967288
    %v169 = vlaneseq
    %v170 = vshrl.u32 %v169, 7
    %v171 = vsub.s32 %v168, %v170
    %v172 = vrot.slane %v68, %v171
    %vm173 = vcmask 130112
    %v174 = vsel %vm173, %v172, %v167
    %v175 = vadd.s32 %v163, 4294967280
    %v176 = vlaneseq
    %v177 = vshrl.u32 %v176, 7
    %v178 = vsub.s32 %v175, %v177
    %v179 = vrot.slane %v70, %v178
    %vm180 = vcmask 195712
    %v181 = vsel %vm180, %v179, %v174
    %v182 = vadd.s32 %v163, 4294967272
    %v183 = vlaneseq
    %v184 = vshrl.u32 %v183, 7
    %v185 = vsub.s32 %v182, %v184
    %v186 = vrot.slane %v72, %v185
    %vm187 = vcmask 261312
    %v188 = vsel %vm187, %v186, %v181
    %v189 = vlaneseq
    %v190 = vshrl.u32 %v189, 7
    %v191 = vsub.s32 %v163, %v190
    %v192 = vrot.slane %v74, %v191
    %v193 = vlaneseq
    %v194 = vshrl.u32 %v193, 7
    %v195 = vsub.s32 %v168, %v194
    %v196 = vrot.slane %v76, %v195
    %v197 = vsel %vm173, %v196, %v192
    %v198 = vlaneseq
    %v199 = vshrl.u32 %v198, 7
    %v200 = vsub.s32 %v175, %v199
    %v201 = vrot.slane %v78, %v200
    %v202 = vsel %vm180, %v201, %v197
    %v203 = vlaneseq
    %v204 = vshrl.u32 %v203, 7
    %v205 = vsub.s32 %v182, %v204
    %v206 = vrot.slane %v80, %v205
    %v207 = vsel %vm187, %v206, %v202
    %v208 = vlaneseq
    %v209 = vshrl.u32 %v208, 7
    %v210 = vsub.s32 %v163, %v209
    %v211 = vrot.slane %v82, %v210
    %v212 = vlaneseq
    %v213 = vshrl.u32 %v212, 7
    %v214 = vsub.s32 %v168, %v213
    %v215 = vrot.slane %v84, %v214
    %v216 = vsel %vm173, %v215, %v211
    %v217 = vlaneseq
    %v218 = vshrl.u32 %v217, 7
    %v219 = vsub.s32 %v175, %v218
    %v220 = vrot.slane %v86, %v219
    %v221 = vsel %vm180, %v220, %v216
    %v222 = vlaneseq
    %v223 = vshrl.u32 %v222, 7
    %v224 = vsub.s32 %v182, %v223
    %v225 = vrot.slane %v88, %v224
    %v226 = vsel %vm187, %v225, %v221
    %v227 = vlaneseq
    %v228 = vshrl.u32 %v227, 7
    %v229 = vsub.s32 %v163, %v228
    %v230 = vrot.slane %v90, %v229
    %v231 = vlaneseq
    %v232 = vshrl.u32 %v231, 7
    %v233 = vsub.s32 %v168, %v232
    %v234 = vrot.slane %v92, %v233
    %v235 = vsel %vm173, %v234, %v230
    %v236 = vlaneseq
    %v237 = vshrl.u32 %v236, 7
    %v238 = vsub.s32 %v175, %v237
    %v239 = vrot.slane %v94, %v238
    %v240 = vsel %vm180, %v239, %v235
    %v241 = vlaneseq
    %v242 = vshrl.u32 %v241, 7
    %v243 = vsub.s32 %v182, %v242
    %v244 = vrot.slane %v96, %v243
    %v245 = vsel %vm187, %v244, %v240
    %vm246 = vcmask 1041409
    %v247 = vsel %vm246, %v207, %v188
    %vm248 = vcmask 1042434
    %v249 = vsel %vm248, %v226, %v247
    %vm250 = vcmask 1043459
    %v251 = vsel %vm250, %v245, %v249
    %v269 = vlaneseq
    %v270 = vshrl.u32 %v269, 7
    %v271 = vsub.s32 %v163, %v270
    %v272 = vrot.slane %v130, %v271
    %v273 = vlaneseq
    %v274 = vshrl.u32 %v273, 7
    %v275 = vsub.s32 %v168, %v274
    %v276 = vrot.slane %v131, %v275
    %v277 = vsel %vm173, %v276, %v272
    %v278 = vlaneseq
    %v279 = vshrl.u32 %v278, 7
    %v280 = vsub.s32 %v175, %v279
    %v281 = vrot.slane %v132, %v280
    %v282 = vsel %vm180, %v281, %v277
    %v283 = vlaneseq
    %v284 = vshrl.u32 %v283, 7
    %v285 = vsub.s32 %v182, %v284
    %v286 = vrot.slane %v133, %v285
    %v287 = vsel %vm187, %v286, %v282
    %v288 = vlaneseq
    %v289 = vshrl.u32 %v288, 7
    %v290 = vsub.s32 %v163, %v289
    %v291 = vrot.slane %v134, %v290
    %v292 = vlaneseq
    %v293 = vshrl.u32 %v292, 7
    %v294 = vsub.s32 %v168, %v293
    %v295 = vrot.slane %v135, %v294
    %v296 = vsel %vm173, %v295, %v291
    %v297 = vlaneseq
    %v298 = vshrl.u32 %v297, 7
    %v299 = vsub.s32 %v175, %v298
    %v300 = vrot.slane %v136, %v299
    %v301 = vsel %vm180, %v300, %v296
    %v302 = vlaneseq
    %v303 = vshrl.u32 %v302, 7
    %v304 = vsub.s32 %v182, %v303
    %v305 = vrot.slane %v137, %v304
    %v306 = vsel %vm187, %v305, %v301
    %v307 = vlaneseq
    %v308 = vshrl.u32 %v307, 7
    %v309 = vsub.s32 %v163, %v308
    %v310 = vrot.slane %v138, %v309
    %v311 = vlaneseq
    %v312 = vshrl.u32 %v311, 7
    %v313 = vsub.s32 %v168, %v312
    %v314 = vrot.slane %v139, %v313
    %v315 = vsel %vm173, %v314, %v310
    %v316 = vlaneseq
    %v317 = vshrl.u32 %v316, 7
    %v318 = vsub.s32 %v175, %v317
    %v319 = vrot.slane %v140, %v318
    %v320 = vsel %vm180, %v319, %v315
    %v321 = vlaneseq
    %v322 = vshrl.u32 %v321, 7
    %v323 = vsub.s32 %v182, %v322
    %v324 = vrot.slane %v141, %v323
    %v325 = vsel %vm187, %v324, %v320
    %v326 = vlaneseq
    %v327 = vshrl.u32 %v326, 7
    %v328 = vsub.s32 %v163, %v327
    %v329 = vrot.slane %v142, %v328
    %v330 = vlaneseq
    %v331 = vshrl.u32 %v330, 7
    %v332 = vsub.s32 %v168, %v331
    %v333 = vrot.slane %v143, %v332
    %v334 = vsel %vm173, %v333, %v329
    %v335 = vlaneseq
    %v336 = vshrl.u32 %v335, 7
    %v337 = vsub.s32 %v175, %v336
    %v338 = vrot.slane %v144, %v337
    %v339 = vsel %vm180, %v338, %v334
    %v340 = vlaneseq
    %v341 = vshrl.u32 %v340, 7
    %v342 = vsub.s32 %v182, %v341
    %v343 = vrot.slane %v145, %v342
    %v344 = vsel %vm187, %v343, %v339
    %vm345 = vcmask 1045509
    %v346 = vsel %vm345, %v306, %v287
    %vm347 = vcmask 1046534
    %v348 = vsel %vm347, %v325, %v346
    %vm349 = vcmask 1047559
    %v350 = vsel %vm349, %v344, %v348
    %vm352 = vcmask 1043456
    %v353 = vsel %vm352, %v251, %v350
    %v354 = vld [vmem:[%s1] sm:$0xff]
    %v355 = vld [vmem:[%s1 + $0x8] sm:$0xff]
    %v356 = vld [vmem:[%s1 + $0x10] sm:$0xff]
    %v357 = vld [vmem:[%s1 + $0x18] sm:$0xff]
    %v358 = vld [vmem:[%s2] sm:$0xff]
    %vm359 = vcmask 261120
    %v361 = vsel %vm359, %v353, 0
    %363 = vmatprep.subr.mxu0 0.0
    %364 = vmatpush1.msra.mxu0 0.0
    %365 = vmatprep.subr.mxu0 0.0
    %366 = vmatpush1.msra.mxu0 0.0
    %367 = vmatprep.subr.mxu0 0.0
    %368 = vmatpush1.msra.mxu0 0.0
    %369 = vmatprep.subr.mxu0 0.0
    %370 = vmatpush1.msra.mxu0 0.0
    %371 = vmatprep.subr.mxu0 0.0
    %372 = vmatpush1.msra.mxu0 0.0
    %373 = vmatprep.subr.mxu0 0.0
    %374 = vmatpush1.msra.mxu0 0.0
    %375 = vmatprep.subr.mxu0 0.0
    %376 = vmatpush1.msra.mxu0 0.0
    %377 = vmatprep.subr.mxu0 0.0
    %378 = vmatpush1.msra.mxu0 0.0
    %379 = vmatprep.subr.mxu0 0.0
    %380 = vmatpush1.msra.mxu0 0.0
    %381 = vmatprep.subr.mxu0 0.0
    %382 = vmatpush1.msra.mxu0 0.0
    %383 = vmatprep.subr.mxu0 0.0
    %384 = vmatpush1.msra.mxu0 0.0
    %385 = vmatprep.subr.mxu0 0.0
    %386 = vmatpush1.msra.mxu0 0.0
    %387 = vmatprep.subr.mxu0 0.0
    %388 = vmatpush1.msra.mxu0 %v357
    %389 = vmatprep.subr.mxu0 0.0
    %390 = vmatpush1.msra.mxu0 %v356
    %391 = vmatprep.subr.mxu0 0.0
    %392 = vmatpush1.msra.mxu0 %v355
    %393 = vmatprep.subr.mxu0 0.0
    %394 = vmatpush1.msra.mxu0 %v354
    %395 = vmatprep.subr.mxu0 0.0
    %396 = vmatpush2.msra.mxu0 0.0
    %397 = vmatprep.subr.mxu0 0.0
    %398 = vmatpush2.msra.mxu0 0.0
    %399 = vmatprep.subr.mxu0 0.0
    %400 = vmatpush2.msra.mxu0 0.0
    %401 = vmatprep.subr.mxu0 0.0
    %402 = vmatpush2.msra.mxu0 0.0
    %403 = vmatprep.subr.mxu0 0.0
    %404 = vmatpush2.msra.mxu0 0.0
    %405 = vmatprep.subr.mxu0 0.0
    %406 = vmatpush2.msra.mxu0 0.0
    %407 = vmatprep.subr.mxu0 0.0
    %408 = vmatpush2.msra.mxu0 0.0
    %409 = vmatprep.subr.mxu0 0.0
    %410 = vmatpush2.msra.mxu0 0.0
    %411 = vmatprep.subr.mxu0 0.0
    %412 = vmatpush2.msra.mxu0 0.0
    %413 = vmatprep.subr.mxu0 0.0
    %414 = vmatpush2.msra.mxu0 0.0
    %415 = vmatprep.subr.mxu0 0.0
    %416 = vmatpush2.msra.mxu0 0.0
    %417 = vmatprep.subr.mxu0 0.0
    %418 = vmatpush2.msra.mxu0 0.0
    %419 = vmatprep.subr.mxu0 0.0
    %420 = vmatpush2.msra.mxu0 0.0
    %421 = vmatprep.subr.mxu0 0.0
    %422 = vmatpush2.msra.mxu0 0.0
    %423 = vmatprep.subr.mxu0 0.0
    %424 = vmatpush2.msra.mxu0 0.0
    %425 = vmatprep.subr.mxu0 0.0
    %426 = vmatpush2.msra.mxu0 0.0
    %427 = vmatprep.mubr.f32.mxu0 0.0
    %428 = vmatmul.mubr.f32.gmra.mxu0 %v361
    %v429 = vpop.f32.mrf.mxu0
    %v430 = vadd.f32 0.0, %v429
    %v431 = vpop.f32.mrf.mxu0
    %432 = vdwg.mxu0
    %v433 = vmax.f32 %v430, 0.0
    %vm434 = vcmask 64512
    %v436 = vsel %vm434, %v433, 0
    %438 = vmatprep.subr.mxu0 0.0
    %439 = vmatpush1.msra.mxu0 0.0
    %440 = vmatprep.subr.mxu0 0.0
    %441 = vmatpush1.msra.mxu0 0.0
    %442 = vmatprep.subr.mxu0 0.0
    %443 = vmatpush1.msra.mxu0 0.0
    %444 = vmatprep.subr.mxu0 0.0
    %445 = vmatpush1.msra.mxu0 0.0
    %446 = vmatprep.subr.mxu0 0.0
    %447 = vmatpush1.msra.mxu0 0.0
    %448 = vmatprep.subr.mxu0 0.0
    %449 = vmatpush1.msra.mxu0 0.0
    %450 = vmatprep.subr.mxu0 0.0
    %451 = vmatpush1.msra.mxu0 0.0
    %452 = vmatprep.subr.mxu0 0.0
    %453 = vmatpush1.msra.mxu0 0.0
    %454 = vmatprep.subr.mxu0 0.0
    %455 = vmatpush1.msra.mxu0 0.0
    %456 = vmatprep.subr.mxu0 0.0
    %457 = vmatpush1.msra.mxu0 0.0
    %458 = vmatprep.subr.mxu0 0.0
    %459 = vmatpush1.msra.mxu0 0.0
    %460 = vmatprep.subr.mxu0 0.0
    %461 = vmatpush1.msra.mxu0 0.0
    %462 = vmatprep.subr.mxu0 0.0
    %463 = vmatpush1.msra.mxu0 0.0
    %464 = vmatprep.subr.mxu0 0.0
    %465 = vmatpush1.msra.mxu0 0.0
    %466 = vmatprep.subr.mxu0 0.0
    %467 = vmatpush1.msra.mxu0 0.0
    %468 = vmatprep.subr.mxu0 0.0
    %469 = vmatpush1.msra.mxu0 %v358
    %470 = vmatprep.subr.mxu0 0.0
    %471 = vmatpush2.msra.mxu0 0.0
    %472 = vmatprep.subr.mxu0 0.0
    %473 = vmatpush2.msra.mxu0 0.0
    %474 = vmatprep.subr.mxu0 0.0
    %475 = vmatpush2.msra.mxu0 0.0
    %476 = vmatprep.subr.mxu0 0.0
    %477 = vmatpush2.msra.mxu0 0.0
    %478 = vmatprep.subr.mxu0 0.0
    %479 = vmatpush2.msra.mxu0 0.0
    %480 = vmatprep.subr.mxu0 0.0
    %481 = vmatpush2.msra.mxu0 0.0
    %482 = vmatprep.subr.mxu0 0.0
    %483 = vmatpush2.msra.mxu0 0.0
    %484 = vmatprep.subr.mxu0 0.0
    %485 = vmatpush2.msra.mxu0 0.0
    %486 = vmatprep.subr.mxu0 0.0
    %487 = vmatpush2.msra.mxu0 0.0
    %488 = vmatprep.subr.mxu0 0.0
    %489 = vmatpush2.msra.mxu0 0.0
    %490 = vmatprep.subr.mxu0 0.0
    %491 = vmatpush2.msra.mxu0 0.0
    %492 = vmatprep.subr.mxu0 0.0
    %493 = vmatpush2.msra.mxu0 0.0
    %494 = vmatprep.subr.mxu0 0.0
    %495 = vmatpush2.msra.mxu0 0.0
    %496 = vmatprep.subr.mxu0 0.0
    %497 = vmatpush2.msra.mxu0 0.0
    %498 = vmatprep.subr.mxu0 0.0
    %499 = vmatpush2.msra.mxu0 0.0
    %500 = vmatprep.subr.mxu0 0.0
    %501 = vmatpush2.msra.mxu0 0.0
    %502 = vmatprep.mubr.f32.mxu0 0.0
    %503 = vmatmul.mubr.f32.gmra.mxu0 %v436
    %v504 = vpop.f32.mrf.mxu0
    %v505 = vadd.f32 0.0, %v504
    %v506 = vpop.f32.mrf.mxu0
    %507 = vdwg.mxu0
    %v509 = vrot.slane %v505, 4
    %v511 = vadd.f32 %v505, %v509
    %v512 = vxor.u32 %v511, 2147483648
    %v513 = vmul.f32 %v512, 1.442695
    %v514 = vpow.pop %v513
    %v515 = vadd.f32 %v514, 1.0
    %v516 = vrcp.pop %v515
    %v517 = vmul.f32 1.0, %v516
    %v518 = vlaneseq
    %v519 = vshrl.u32 %v518, 7
    %v520 = vsub.s32 0, %v519
    %v521 = vrot.slane %v517, %v520
    %523 = vbcast.lane.b32.xlu0 %v521, 256
    %v524 = vpop.permute.xlu0 %523
    %s526 = sor.u32 256, 8
    %527 = vbcast.lane.b32.xlu0 %v521, %s526
    %v528 = vpop.permute.xlu0 %527
    %s530 = sor.u32 256, 16
    %531 = vbcast.lane.b32.xlu0 %v521, %s530
    %v532 = vpop.permute.xlu0 %531
    %s534 = sor.u32 256, 24
    %535 = vbcast.lane.b32.xlu0 %v521, %s534
    %v536 = vpop.permute.xlu0 %535
    %v537 = vlaneseq
    %v538 = vshrl.u32 %v537, 7
    %v539 = vsub.s32 1, %v538
    %v540 = vrot.slane %v517, %v539
    %542 = vbcast.lane.b32.xlu0 %v540, 256
    %v543 = vpop.permute.xlu0 %542
    %s545 = sor.u32 256, 8
    %546 = vbcast.lane.b32.xlu0 %v540, %s545
    %v547 = vpop.permute.xlu0 %546
    %s549 = sor.u32 256, 16
    %550 = vbcast.lane.b32.xlu0 %v540, %s549
    %v551 = vpop.permute.xlu0 %550
    %s553 = sor.u32 256, 24
    %554 = vbcast.lane.b32.xlu0 %v540, %s553
    %v555 = vpop.permute.xlu0 %554
    %v556 = vlaneseq
    %v557 = vshrl.u32 %v556, 7
    %v558 = vsub.s32 2, %v557
    %v559 = vrot.slane %v517, %v558
    %561 = vbcast.lane.b32.xlu0 %v559, 256
    %v562 = vpop.permute.xlu0 %561
    %s564 = sor.u32 256, 8
    %565 = vbcast.lane.b32.xlu0 %v559, %s564
    %v566 = vpop.permute.xlu0 %565
    %s568 = sor.u32 256, 16
    %569 = vbcast.lane.b32.xlu0 %v559, %s568
    %v570 = vpop.permute.xlu0 %569
    %s572 = sor.u32 256, 24
    %573 = vbcast.lane.b32.xlu0 %v559, %s572
    %v574 = vpop.permute.xlu0 %573
    %v575 = vlaneseq
    %v576 = vshrl.u32 %v575, 7
    %v577 = vsub.s32 3, %v576
    %v578 = vrot.slane %v517, %v577
    %580 = vbcast.lane.b32.xlu0 %v578, 256
    %v581 = vpop.permute.xlu0 %580
    %s583 = sor.u32 256, 8
    %584 = vbcast.lane.b32.xlu0 %v578, %s583
    %v585 = vpop.permute.xlu0 %584
    %s587 = sor.u32 256, 16
    %588 = vbcast.lane.b32.xlu0 %v578, %s587
    %v589 = vpop.permute.xlu0 %588
    %s591 = sor.u32 256, 24
    %592 = vbcast.lane.b32.xlu0 %v578, %s591
    %v593 = vpop.permute.xlu0 %592
    %v594 = vmul.f32 %v49, %v524
    %v595 = vmul.f32 %v50, %v528
    %v596 = vmul.f32 %v51, %v532
    %v597 = vmul.f32 %v52, %v536
    %v598 = vmul.f32 %v53, %v543
    %v599 = vmul.f32 %v54, %v547
    %v600 = vmul.f32 %v55, %v551
    %v601 = vmul.f32 %v56, %v555
    %v602 = vmul.f32 %v57, %v562
    %v603 = vmul.f32 %v58, %v566
    %v604 = vmul.f32 %v59, %v570
    %v605 = vmul.f32 %v60, %v574
    %v606 = vmul.f32 %v61, %v581
    %v607 = vmul.f32 %v62, %v585
    %v608 = vmul.f32 %v63, %v589
    %v609 = vmul.f32 %v64, %v593
    %v610 = vmax.f32 %v594, %v595
    %v611 = vmax.f32 %v610, %v596
    %v612 = vmax.f32 %v611, %v597
    %v613 = vrot.slane %v612, 4
    %v614 = vmax.f32 %v612, %v613
    %v615 = vrot.slane %v614, 2
    %v616 = vmax.f32 %v614, %v615
    %v617 = vrot.slane %v616, 1
    %v618 = vmax.f32 %v616, %v617
    %v619 = vmax.f32 %v598, %v599
    %v620 = vmax.f32 %v619, %v600
    %v621 = vmax.f32 %v620, %v601
    %v622 = vrot.slane %v621, 4
    %v623 = vmax.f32 %v621, %v622
    %v624 = vrot.slane %v623, 2
    %v625 = vmax.f32 %v623, %v624
    %v626 = vrot.slane %v625, 1
    %v627 = vmax.f32 %v625, %v626
    %v628 = vmax.f32 %v602, %v603
    %v629 = vmax.f32 %v628, %v604
    %v630 = vmax.f32 %v629, %v605
    %v631 = vrot.slane %v630, 4
    %v632 = vmax.f32 %v630, %v631
    %v633 = vrot.slane %v632, 2
    %v634 = vmax.f32 %v632, %v633
    %v635 = vrot.slane %v634, 1
    %v636 = vmax.f32 %v634, %v635
    %v637 = vmax.f32 %v606, %v607
    %v638 = vmax.f32 %v637, %v608
    %v639 = vmax.f32 %v638, %v609
    %v640 = vrot.slane %v639, 4
    %v641 = vmax.f32 %v639, %v640
    %v642 = vrot.slane %v641, 2
    %v643 = vmax.f32 %v641, %v642
    %v644 = vrot.slane %v643, 1
    %v645 = vmax.f32 %v643, %v644
    %v646 = vadd.f32 %v594, %v595
    %v647 = vadd.f32 %v646, %v596
    %v648 = vadd.f32 %v647, %v597
    %v649 = vrot.slane %v648, 4
    %v650 = vadd.f32 %v648, %v649
    %v651 = vrot.slane %v650, 2
    %v652 = vadd.f32 %v650, %v651
    %v653 = vrot.slane %v652, 1
    %v654 = vadd.f32 %v652, %v653
    %v655 = vadd.f32 %v598, %v599
    %v656 = vadd.f32 %v655, %v600
    %v657 = vadd.f32 %v656, %v601
    %v658 = vrot.slane %v657, 4
    %v659 = vadd.f32 %v657, %v658
    %v660 = vrot.slane %v659, 2
    %v661 = vadd.f32 %v659, %v660
    %v662 = vrot.slane %v661, 1
    %v663 = vadd.f32 %v661, %v662
    %v664 = vadd.f32 %v602, %v603
    %v665 = vadd.f32 %v664, %v604
    %v666 = vadd.f32 %v665, %v605
    %v667 = vrot.slane %v666, 4
    %v668 = vadd.f32 %v666, %v667
    %v669 = vrot.slane %v668, 2
    %v670 = vadd.f32 %v668, %v669
    %v671 = vrot.slane %v670, 1
    %v672 = vadd.f32 %v670, %v671
    %v673 = vadd.f32 %v606, %v607
    %v674 = vadd.f32 %v673, %v608
    %v675 = vadd.f32 %v674, %v609
    %v676 = vrot.slane %v675, 4
    %v677 = vadd.f32 %v675, %v676
    %v678 = vrot.slane %v677, 2
    %v679 = vadd.f32 %v677, %v678
    %v680 = vrot.slane %v679, 1
    %v681 = vadd.f32 %v679, %v680
    %v682 = vrcp.pop 32.0
    %v683 = vmul.f32 %v654, %v682
    %v684 = vmul.f32 %v663, %v682
    %v685 = vmul.f32 %v672, %v682
    %v686 = vmul.f32 %v681, %v682
    %s687 = sld [smem:[#allocation7]]
    %s688 = sld [smem:[#allocation7 + $0x1]]
    %s689 = sld [smem:[#allocation7 + $0x2]]
    %s690 = sld [smem:[#allocation7 + $0x3]]
    %s691 = sld [smem:[#allocation7 + $0x4]]
    %s692 = sld [smem:[#allocation7 + $0x5]]
    %s693 = sld [smem:[#allocation7 + $0x6]]
    %s694 = sld [smem:[#allocation7 + $0x7]]
    %s695 = sld [smem:[#allocation7 + $0x8]]
    %s696 = sld [smem:[#allocation7 + $0x9]]
    %s697 = sld [smem:[#allocation7 + $0xa]]
    %s698 = sld [smem:[#allocation7 + $0xb]]
    %s699 = sld [smem:[#allocation7 + $0xc]]
    %s700 = sld [smem:[#allocation7 + $0xd]]
    %v705 = vsel %vm246, %v627, %v618
    %v706 = vsel %vm248, %v636, %v705
    %v707 = vsel %vm250, %v645, %v706
    %709 = vrot.lane.b32.xlu0 %v707, 3
    %v710 = vpop.permute.xlu0 %709
    %v715 = vsel %vm246, %v684, %v683
    %v716 = vsel %vm248, %v685, %v715
    %v717 = vsel %vm250, %v686, %v716
    %719 = vrot.lane.b32.xlu0 %v717, 3
    %v720 = vpop.permute.xlu0 %719
    %v721 = vstv %s687
    %v722 = vmul.f32 %v721, %v710
    %v723 = vstv %s694
    %v724 = vmul.f32 %v723, %v720
    %v725 = vadd.f32 %v722, %v724
    %vm726 = vcmp.ge.s32.totalorder %v163, 3
    %vm727 = vcmp.le.s32.totalorder %v163, 130
    %vm728 = vmand %vm726, %vm727
    %v729 = vsel %vm728, %v725, 0.0
    %v730 = vadd.f32 %v729, 0.0
    %731 = vrot.lane.b32.xlu0 %v707, 2
    %v732 = vpop.permute.xlu0 %731
    %733 = vrot.lane.b32.xlu0 %v717, 2
    %v734 = vpop.permute.xlu0 %733
    %v735 = vstv %s688
    %v736 = vmul.f32 %v735, %v732
    %v737 = vstv %s695
    %v738 = vmul.f32 %v737, %v734
    %v739 = vadd.f32 %v736, %v738
    %vm740 = vcmp.ge.s32.totalorder %v163, 2
    %vm741 = vcmp.le.s32.totalorder %v163, 129
    %vm742 = vmand %vm740, %vm741
    %v743 = vsel %vm742, %v739, 0.0
    %v744 = vadd.f32 %v730, %v743
    %745 = vrot.lane.b32.xlu0 %v707, 1
    %v746 = vpop.permute.xlu0 %745
    %747 = vrot.lane.b32.xlu0 %v717, 1
    %v748 = vpop.permute.xlu0 %747
    %v749 = vstv %s689
    %v750 = vmul.f32 %v749, %v746
    %v751 = vstv %s696
    %v752 = vmul.f32 %v751, %v748
    %v753 = vadd.f32 %v750, %v752
    %vm754 = vcmp.ge.s32.totalorder %v163, 1
    %vm755 = vcmp.le.s32.totalorder %v163, 128
    %vm756 = vmand %vm754, %vm755
    %v757 = vsel %vm756, %v753, 0.0
    %v758 = vadd.f32 %v744, %v757
    %v759 = vstv %s690
    %v760 = vmul.f32 %v759, %v618
    %v761 = vmul.f32 %v759, %v627
    %v762 = vmul.f32 %v759, %v636
    %v763 = vmul.f32 %v759, %v645
    %v764 = vstv %s697
    %v765 = vmul.f32 %v764, %v683
    %v766 = vmul.f32 %v764, %v684
    %v767 = vmul.f32 %v764, %v685
    %v768 = vmul.f32 %v764, %v686
    %v769 = vadd.f32 %v760, %v765
    %v770 = vadd.f32 %v761, %v766
    %v771 = vadd.f32 %v762, %v767
    %v772 = vadd.f32 %v763, %v768
    %v777 = vsel %vm246, %v770, %v769
    %v778 = vsel %vm248, %v771, %v777
    %v779 = vsel %vm250, %v772, %v778
    %v781 = vadd.f32 %v758, %v779
    %782 = vrot.lane.b32.xlu0 %v707, 127
    %v783 = vpop.permute.xlu0 %782
    %784 = vrot.lane.b32.xlu0 %v717, 127
    %v785 = vpop.permute.xlu0 %784
    %v786 = vstv %s691
    %v787 = vmul.f32 %v786, %v783
    %v788 = vstv %s698
    %v789 = vmul.f32 %v788, %v785
    %v790 = vadd.f32 %v787, %v789
    %vm791 = vcmp.ge.s32.totalorder %v163, 4294967295
    %vm792 = vcmp.le.s32.totalorder %v163, 126
    %vm793 = vmand %vm791, %vm792
    %v794 = vsel %vm793, %v790, 0.0
    %v795 = vadd.f32 %v781, %v794
    %796 = vrot.lane.b32.xlu0 %v707, 126
    %v797 = vpop.permute.xlu0 %796
    %798 = vrot.lane.b32.xlu0 %v717, 126
    %v799 = vpop.permute.xlu0 %798
    %v800 = vstv %s692
    %v801 = vmul.f32 %v800, %v797
    %v802 = vstv %s699
    %v803 = vmul.f32 %v802, %v799
    %v804 = vadd.f32 %v801, %v803
    %vm805 = vcmp.ge.s32.totalorder %v163, 4294967294
    %vm806 = vcmp.le.s32.totalorder %v163, 125
    %vm807 = vmand %vm805, %vm806
    %v808 = vsel %vm807, %v804, 0.0
    %v809 = vadd.f32 %v795, %v808
    %810 = vrot.lane.b32.xlu0 %v707, 125
    %v811 = vpop.permute.xlu0 %810
    %812 = vrot.lane.b32.xlu0 %v717, 125
    %v813 = vpop.permute.xlu0 %812
    %v814 = vstv %s693
    %v815 = vmul.f32 %v814, %v811
    %v816 = vstv %s700
    %v817 = vmul.f32 %v816, %v813
    %v818 = vadd.f32 %v815, %v817
    %vm819 = vcmp.ge.s32.totalorder %v163, 4294967293
    %vm820 = vcmp.le.s32.totalorder %v163, 124
    %vm821 = vmand %vm819, %vm820
    %v822 = vsel %vm821, %v818, 0.0
    %v823 = vadd.f32 %v809, %v822
    %s824 = sld [smem:[#allocation2]]
    %v825 = vstv %s824
    %v826 = vadd.f32 %v823, %v825
    %v827 = vxor.u32 %v826, 2147483648
    %v828 = vmul.f32 %v827, 1.442695
    %v829 = vpow.pop %v828
    %v830 = vadd.f32 %v829, 1.0
    %v831 = vrcp.pop %v830
    %v832 = vmul.f32 1.0, %v831
    %v835 = vunpack.c.l.s4 1966171168
    %v836 = vunpack.c.0.s8 %v835
    %v837 = vlaneseq
    %v838 = vshrl.u32 %v837, 7
    %v839 = vsub.s32 %v836, %v838
    %v840 = vrot.slane %v832, %v839
    %v841 = vcombine.high %v840, %v840
    %v843 = vunpack.c.l.s4 1966171168
    %v844 = vunpack.c.0.s8 %v843
    %v845 = vlaneseq
    %v846 = vshrl.u32 %v845, 7
    %v847 = vsub.s32 %v844, %v846
    %v848 = vrot.slane %v840, %v847
    %v850 = vunpack.c.l.s4 1966171168
    %v851 = vunpack.c.0.s8 %v850
    %v852 = vlaneseq
    %v853 = vshrl.u32 %v852, 7
    %v854 = vsub.s32 %v851, %v853
    %v855 = vrot.slane %v841, %v854
    %v856 = vcombine.high %v848, %v848
    %v857 = vcombine.high %v855, %v855
    %v858 = vlaneseq
    %v859 = vshrl.u32 %v858, 7
    %v860 = vsub.s32 0, %v859
    %v861 = vrot.slane %v848, %v860
    %v862 = vlaneseq
    %v863 = vshrl.u32 %v862, 7
    %v864 = vsub.s32 0, %v863
    %v865 = vrot.slane %v855, %v864
    %v866 = vlaneseq
    %v867 = vshrl.u32 %v866, 7
    %v868 = vsub.s32 0, %v867
    %v869 = vrot.slane %v856, %v868
    %v870 = vlaneseq
    %v871 = vshrl.u32 %v870, 7
    %v872 = vsub.s32 0, %v871
    %v873 = vrot.slane %v857, %v872
    %v878 = vmul.f32 %v594, %v861
    %v879 = vmul.f32 %v595, %v861
    %v880 = vmul.f32 %v596, %v861
    %v881 = vmul.f32 %v597, %v861
    %v882 = vmul.f32 %v598, %v865
    %v883 = vmul.f32 %v599, %v865
    %v884 = vmul.f32 %v600, %v865
    %v885 = vmul.f32 %v601, %v865
    %v886 = vmul.f32 %v602, %v869
    %v887 = vmul.f32 %v603, %v869
    %v888 = vmul.f32 %v604, %v869
    %v889 = vmul.f32 %v605, %v869
    %v890 = vmul.f32 %v606, %v873
    %v891 = vmul.f32 %v607, %v873
    %v892 = vmul.f32 %v608, %v873
    %v893 = vmul.f32 %v609, %v873
    %v894 = vadd.f32 %v878, %v49
    %v895 = vadd.f32 %v879, %v50
    %v896 = vadd.f32 %v880, %v51
    %v897 = vadd.f32 %v881, %v52
    %v898 = vadd.f32 %v882, %v53
    %v899 = vadd.f32 %v883, %v54
    %v900 = vadd.f32 %v884, %v55
    %v901 = vadd.f32 %v885, %v56
    %v902 = vadd.f32 %v886, %v57
    %v903 = vadd.f32 %v887, %v58
    %v904 = vadd.f32 %v888, %v59
    %v905 = vadd.f32 %v889, %v60
    %v906 = vadd.f32 %v890, %v61
    %v907 = vadd.f32 %v891, %v62
    %v908 = vadd.f32 %v892, %v63
    %v909 = vadd.f32 %v893, %v64
    %910 = vst [vmem:[#allocation8] sm:$0xff] %v894
    %911 = vst [vmem:[#allocation8 + $0x8] sm:$0xff] %v895
    %912 = vst [vmem:[#allocation8 + $0x10] sm:$0xff] %v896
    %913 = vst [vmem:[#allocation8 + $0x18] sm:$0xff] %v897
    %914 = vst [vmem:[#allocation8 + $0x20] sm:$0xff] %v898
    %915 = vst [vmem:[#allocation8 + $0x28] sm:$0xff] %v899
    %916 = vst [vmem:[#allocation8 + $0x30] sm:$0xff] %v900
    %917 = vst [vmem:[#allocation8 + $0x38] sm:$0xff] %v901
    %918 = vst [vmem:[#allocation8 + $0x40] sm:$0xff] %v902
    %919 = vst [vmem:[#allocation8 + $0x48] sm:$0xff] %v903
    %920 = vst [vmem:[#allocation8 + $0x50] sm:$0xff] %v904
    %921 = vst [vmem:[#allocation8 + $0x58] sm:$0xff] %v905
    %922 = vst [vmem:[#allocation8 + $0x60] sm:$0xff] %v906
    %923 = vst [vmem:[#allocation8 + $0x68] sm:$0xff] %v907
    %924 = vst [vmem:[#allocation8 + $0x70] sm:$0xff] %v908
    %925 = vst [vmem:[#allocation8 + $0x78] sm:$0xff] %v909
    // Predicated region
    $region30: #{tpu_custom_call.1} parent=1 // pred_check
      _
    $region31: #{tpu_custom_call.1} parent=1 // pred_check_branch
      %927 = sbr.rel (0) target = $region33
    $region32: #{tpu_custom_call.1} parent=1 // pred_region
      %s929 = ssub.s32 2048, 2048
      %930 = vsyncadd [#allocation5], %s929
      %s931 = sshll.u32 [#allocation8], 4
      %s932 = int_to_ptr.vmem [resolvable:$true] %s931
      %937 = dma.vmem_to_hbm [thread:$0]  %s932, 2048, %s5, [#allocation5], 128, 128, 8
    $region33: #{tpu_custom_call.1} parent=1 // pred_fallthru
      _
    // Predicated region
    $region34: #{tpu_custom_call.1} parent=1 // pred_check
      _
    $region35: #{tpu_custom_call.1} parent=1 // pred_check_branch
      %939 = sbr.rel (0) target = $region37
    $region36: #{tpu_custom_call.1} parent=1 // pred_region
      %940 = dma.done [#allocation5], 2048
    $region37: #{tpu_custom_call.1} parent=1 // pred_fallthru
      _
    %941 = vsyncpa [#allocation4], 1
    %942 = vsyncpa [#allocation5], 1
    %943 = vsyncpa [#allocation6], 1

</llo_original>
